<compile_context>
chip_gen: v5e
topology: v5e:2x2
jax: 0.10.0
libtpu: 0.0.40
codegen_flags: <defaults>
</compile_context>

<pallas_src>
import jax
import jax.numpy as jnp
from jax.experimental import pallas as pl
from jax.experimental.pallas import tpu as pltpu


_LANE = 128   # vreg lane width
_SUB = 16     # sublane multiple safe for both f32 (8) and packed bf16 (16)


def _round_up(x, m):
    return ((x + m - 1) // m) * m


def _vmem_capacity_bytes():
    try:
        return int(pltpu.get_tpu_info().vmem_capacity_bytes)
    except Exception:
        return 64 * 1024 * 1024   # conservative default (v7x per-TC VMEM)


def _num_tensorcores():
    try:
        info = pltpu.get_tpu_info()
        for attr in ("num_cores", "core_count", "num_tensorcores",
                     "tensorcores_per_chip"):
            v = getattr(info, attr, None)
            if v:
                return int(v)
    except Exception:
        pass
    try:
        return max(1, int(getattr(jax.devices()[0], "num_cores", 1) or 1))
    except Exception:
        return 1


def _mlp_kernel(x_ref, w1_ref, b1_ref, w2_ref, b2_ref, o_ref):
    # Cast x to the weight (compute) dtype in-kernel: VPU slot, hidden under the
    # MXU, instead of a separate XLA cast pass over x in HBM.
    x = x_ref[...].astype(w1_ref.dtype)
    # fc1 on the MXU with f32 accumulation.
    h = jnp.dot(x, w1_ref[...], preferred_element_type=jnp.float32)
    # Bias + ReLU in f32 on the VPU.
    h = jnp.maximum(h + b1_ref[...], 0.0)
    # fc2 on the MXU, f32 accumulation.
    y = jnp.dot(h.astype(w2_ref.dtype), w2_ref[...],
                preferred_element_type=jnp.float32)
    o_ref[...] = (y + b2_ref[...]).astype(o_ref.dtype)


def prepare_params(w1, b1, w2, b2, *, compute_dtype=jnp.bfloat16):
    """One-time weight prep: pad fc2's out-dim to a lane multiple, cast weights
    to the compute dtype, biases to 2-D f32. Hoist out of the hot path when the
    same weights are reused across calls (inference)."""
    in_dim, hidden_dim = w1.shape
    out_dim = w2.shape[1]
    out_pad = max(_LANE, _round_up(out_dim, _LANE))
    w2p, b2p = w2, b2
    if out_pad != out_dim:
        w2p = jnp.pad(w2, ((0, 0), (0, out_pad - out_dim)))
        b2p = jnp.pad(b2, (0, out_pad - out_dim))
    return dict(
        w1=w1.astype(compute_dtype),
        b1=b1.reshape(1, hidden_dim).astype(jnp.float32),
        w2=w2p.astype(compute_dtype),
        b2=b2p.reshape(1, out_pad).astype(jnp.float32),
        out_dim=out_dim,
    )


def mlp_forward_prepared(x, params, *, tile_batch=None):
    """relu(x @ w1 + b1) @ w2 + b2 with pre-prepared params."""
    B, in_dim = x.shape
    w1, b1, w2, b2 = params["w1"], params["b1"], params["w2"], params["b2"]
    out_dim = params["out_dim"]
    hidden_dim = w1.shape[1]
    out_pad = w2.shape[1]
    out_dtype = x.dtype

    x_bytes = jnp.dtype(x.dtype).itemsize
    c_bytes = jnp.dtype(w1.dtype).itemsize
    o_bytes = jnp.dtype(out_dtype).itemsize

    # ---- generation-aware VMEM budget ---------------------------------------
    vmem_cap = _vmem_capacity_bytes()
    vmem_limit = int(min(vmem_cap - 16 * 1024 * 1024, vmem_cap * 0.8))
    budget = vmem_limit - 6 * 1024 * 1024

    def _vmem_bytes(tb, single_buffered_weights=True):
        wmul = 1 if single_buffered_weights else 2
        x_tiles = 2 * tb * in_dim * x_bytes                 # double-buffered in
        o_tiles = 2 * tb * out_pad * o_bytes                # double-buffered out
        weights = wmul * (in_dim * hidden_dim + hidden_dim * out_pad) * c_bytes
        biases = wmul * (hidden_dim + out_pad) * 4
        interm = tb * (in_dim * c_bytes + (hidden_dim + out_pad) * 4)
        return x_tiles + o_tiles + weights + biases + interm

    # ---- choose tile_batch ----------------------------------------------------
    if tile_batch is None:
        tile_batch = 512
    tile_batch = max(_SUB, (int(tile_batch) // _SUB) * _SUB)
    tile_batch = min(tile_batch, _round_up(B, _SUB))

    while tile_batch > _SUB and _vmem_bytes(tile_batch) > budget:
        tile_batch = max(_SUB, (tile_batch // 2 // _SUB) * _SUB)
    # TODO(synk): if w1/w2 alone exceed the budget (very large hidden/in dims),
    # add a grid axis over fc2's output dim (or a K-reduction axis with a VMEM
    # f32 accumulator) instead of only shrinking tile_batch.

    # Only split the batch when it buys something: single-TC chips (v5e/v6e)
    # never benefit; dual-TC chips (v7x) only when each half has real work.
    num_tc = _num_tensorcores()
    if num_tc >= 2 and B >= 512 and pl.cdiv(B, tile_batch) < 2:
        tile_batch = max(_SUB, _round_up(pl.cdiv(B, 2), _SUB))
    num_tiles = pl.cdiv(B, tile_batch)

    def _call(single_buffered_weights):
        wkw = ({"pipeline_mode": pl.Buffered(1)}
               if single_buffered_weights else {})
        return pl.pallas_call(
            _mlp_kernel,
            out_shape=jax.ShapeDtypeStruct((B, out_pad), out_dtype),
            grid=(num_tiles,),
            in_specs=[
                # x: tiled over batch, full feature dim, native dtype; Pallas
                # handles the ragged trailing block (no wrapper batch pad).
                pl.BlockSpec((tile_batch, in_dim), lambda i: (i, 0)),
                # Grid-invariant weights / biases: single-buffered if possible.
                pl.BlockSpec((in_dim, hidden_dim), lambda i: (0, 0), **wkw),
                pl.BlockSpec((1, hidden_dim), lambda i: (0, 0), **wkw),
                pl.BlockSpec((hidden_dim, out_pad), lambda i: (0, 0), **wkw),
                pl.BlockSpec((1, out_pad), lambda i: (0, 0), **wkw),
            ],
            out_specs=pl.BlockSpec((tile_batch, out_pad), lambda i: (i, 0)),
            compiler_params=pltpu.CompilerParams(
                dimension_semantics=("parallel",),
                vmem_limit_bytes=int(vmem_limit),
            ),
        )(x, w1, b1, w2, b2)

    try:
        out = _call(True)
    except Exception:
        # Fallback: default (double-buffered) weight blocks.
        out = _call(False)

    if out_pad != out_dim:
        out = out[:, :out_dim]
    return out


def mlp_forward(x, w1, b1, w2, b2, *, tile_batch=None,
                compute_dtype=jnp.bfloat16):
    """Fused MLP forward: relu(x @ w1 + b1) @ w2 + b2.

    x : [B, input_dim]
    w1: [input_dim, hidden_dim]   b1: [hidden_dim]
    w2: [hidden_dim, output_dim]  b2: [output_dim]
    returns [B, output_dim] in x.dtype. Use compute_dtype=jnp.float32 for
    regression workloads that need tighter numerics than bf16 MXU inputs.
    """
    params = prepare_params(w1, b1, w2, b2, compute_dtype=compute_dtype)
    return mlp_forward_prepared(x, params, tile_batch=tile_batch)


def init_linear_params(key, in_features, out_features, dtype=jnp.float32):
    """Deterministic init matching torch.nn.Linear's U(-1/sqrt(fan_in), +1/sqrt(fan_in)).
    Returns weight already transposed to [in_features, out_features]."""
    kw, kb = jax.random.split(key)
    bound = 1.0 / jnp.sqrt(jnp.asarray(in_features, dtype))
    w = jax.random.uniform(kw, (in_features, out_features), dtype,
                           minval=-bound, maxval=bound)
    b = jax.random.uniform(kb, (out_features,), dtype,
                           minval=-bound, maxval=bound)
    return w, b


if __name__ == "__main__":
    # Small, module-consistent shapes.
    batch = 16
    input_dim = 32
    hidden_dim = 64
    output_dim = 8

    key = jax.random.PRNGKey(0)
    kx, k1, k2 = jax.random.split(key, 3)

    x = jax.random.normal(kx, (batch, input_dim), jnp.float32)
    w1, b1 = init_linear_params(k1, input_dim, hidden_dim)
    w2, b2 = init_linear_params(k2, hidden_dim, output_dim)

    # Weight-stationary style: prepare params once, reuse across calls.
    params = prepare_params(w1, b1, w2, b2)
    out = mlp_forward_prepared(x, params)
    out = jax.block_until_ready(out)

    # Cross-check against plain-JAX f32 reference of the PyTorch forward.
    ref = jnp.maximum(x @ w1 + b1, 0.0) @ w2 + b2
    assert out.shape == (batch, output_dim), out.shape
    # bf16 MXU inputs with f32 accumulation -> looser tolerance vs f32 ref.
    max_err = float(jnp.max(jnp.abs(out - ref)))
    assert jnp.allclose(out, ref, atol=5e-2, rtol=5e-2), f"mismatch: {max_err}"

    print("KERNEL_OK")
</pallas_src>

<mosaic_0001>
module attributes {stable_mosaic.version = 11 : i64} {
  func.func @_mlp_kernel(%arg0: i32, %arg1: memref<16x32xf32, #tpu.memory_space<vmem>>, %arg2: memref<32x64xbf16, #tpu.memory_space<vmem>>, %arg3: memref<1x64xf32, #tpu.memory_space<vmem>>, %arg4: memref<64x128xbf16, #tpu.memory_space<vmem>>, %arg5: memref<1x128xf32, #tpu.memory_space<vmem>>, %arg6: memref<16x128xf32, #tpu.memory_space<vmem>>) attributes {dimension_semantics = [#tpu.dimension_semantics<parallel>], iteration_bounds = array<i64: 1>, scalar_prefetch = 0 : i64, scratch_operands = 0 : i64, tpu.core_type = #tpu.core_type<tc>, window_params = [{transform_indices = @transform_0, window_bounds = array<i64: 16, 32>}, {pipeline_mode = #tpu.pipeline_mode<synchronous>, transform_indices = @transform_1, window_bounds = array<i64: 32, 64>}, {pipeline_mode = #tpu.pipeline_mode<synchronous>, transform_indices = @transform_2, window_bounds = array<i64: 1, 64>}, {pipeline_mode = #tpu.pipeline_mode<synchronous>, transform_indices = @transform_3, window_bounds = array<i64: 64, 128>}, {pipeline_mode = #tpu.pipeline_mode<synchronous>, transform_indices = @transform_4, window_bounds = array<i64: 1, 128>}, {transform_indices = @transform_5, window_bounds = array<i64: 16, 128>}]} {
    %c0 = arith.constant 0 : index
    %c0_0 = arith.constant 0 : index
    %0 = vector.load %arg1[%c0, %c0_0] : memref<16x32xf32, #tpu.memory_space<vmem>>, vector<16x32xf32>
    %1 = arith.truncf %0 : vector<16x32xf32> to vector<16x32xbf16>
    %c0_1 = arith.constant 0 : index
    %c0_2 = arith.constant 0 : index
    %2 = vector.load %arg2[%c0_1, %c0_2] : memref<32x64xbf16, #tpu.memory_space<vmem>>, vector<32x64xbf16>
    %cst = arith.constant dense<0.000000e+00> : vector<16x64xf32>
    %3 = tpu.matmul %1, %2, %cst {dimension_numbers = #tpu.dot_dimension_numbers<[1], [0], [0], [1], [0, 0, 1, 1], [], []>} : vector<16x32xbf16>, vector<32x64xbf16>, vector<16x64xf32> -> vector<16x64xf32>
    %c0_3 = arith.constant 0 : index
    %c0_4 = arith.constant 0 : index
    %4 = vector.load %arg3[%c0_3, %c0_4] : memref<1x64xf32, #tpu.memory_space<vmem>>, vector<1x64xf32>
    %5 = vector.broadcast %4 : vector<1x64xf32> to vector<16x64xf32>
    %6 = arith.addf %3, %5 : vector<16x64xf32>
    %cst_5 = arith.constant 0.000000e+00 : f32
    %7 = vector.broadcast %cst_5 : f32 to vector<16x64xf32>
    %8 = arith.maximumf %6, %7 : vector<16x64xf32>
    %9 = arith.truncf %8 : vector<16x64xf32> to vector<16x64xbf16>
    %c0_6 = arith.constant 0 : index
    %c0_7 = arith.constant 0 : index
    %10 = vector.load %arg4[%c0_6, %c0_7] : memref<64x128xbf16, #tpu.memory_space<vmem>>, vector<64x128xbf16>
    %cst_8 = arith.constant dense<0.000000e+00> : vector<16x128xf32>
    %11 = tpu.matmul %9, %10, %cst_8 {dimension_numbers = #tpu.dot_dimension_numbers<[1], [0], [0], [1], [0, 0, 1, 1], [], []>} : vector<16x64xbf16>, vector<64x128xbf16>, vector<16x128xf32> -> vector<16x128xf32>
    %c0_9 = arith.constant 0 : index
    %c0_10 = arith.constant 0 : index
    %12 = vector.load %arg5[%c0_9, %c0_10] : memref<1x128xf32, #tpu.memory_space<vmem>>, vector<1x128xf32>
    %13 = vector.broadcast %12 : vector<1x128xf32> to vector<16x128xf32>
    %14 = arith.addf %11, %13 : vector<16x128xf32>
    %c0_11 = arith.constant 0 : index
    %c0_12 = arith.constant 0 : index
    %15 = vector.load %arg6[%c0_11, %c0_12] : memref<16x128xf32, #tpu.memory_space<vmem>>, vector<16x128xf32>
    tpu.vector_store %arg6[%c0_11, %c0_12], %14 {strides = array<i32>} : memref<16x128xf32, #tpu.memory_space<vmem>>, vector<16x128xf32>,
    return
  }
  func.func @transform_0(%arg0: i32) -> (i32, i32) {
    %c0_i32 = arith.constant 0 : i32
    %c0_i32_0 = arith.constant 0 : i32
    return %arg0, %c0_i32 : i32, i32
  }
  func.func @transform_1(%arg0: i32) -> (i32, i32) {
    %c0_i32 = arith.constant 0 : i32
    %c0_i32_0 = arith.constant 0 : i32
    %c0_i32_1 = arith.constant 0 : i32
    return %c0_i32, %c0_i32_0 : i32, i32
  }
  func.func @transform_2(%arg0: i32) -> (i32, i32) {
    %c0_i32 = arith.constant 0 : i32
    %c0_i32_0 = arith.constant 0 : i32
    %c0_i32_1 = arith.constant 0 : i32
    return %c0_i32, %c0_i32_0 : i32, i32
  }
  func.func @transform_3(%arg0: i32) -> (i32, i32) {
    %c0_i32 = arith.constant 0 : i32
    %c0_i32_0 = arith.constant 0 : i32
    %c0_i32_1 = arith.constant 0 : i32
    return %c0_i32, %c0_i32_0 : i32, i32
  }
  func.func @transform_4(%arg0: i32) -> (i32, i32) {
    %c0_i32 = arith.constant 0 : i32
    %c0_i32_0 = arith.constant 0 : i32
    %c0_i32_1 = arith.constant 0 : i32
    return %c0_i32, %c0_i32_0 : i32, i32
  }
  func.func @transform_5(%arg0: i32) -> (i32, i32) {
    %c0_i32 = arith.constant 0 : i32
    %c0_i32_0 = arith.constant 0 : i32
    return %arg0, %c0_i32 : i32, i32
  }
}

module attributes {stable_mosaic.version = 11 : i64} {
  func.func @_mlp_kernel(%arg0: i32, %arg1: memref<16x32xf32, #tpu.memory_space<vmem>>, %arg2: memref<32x64xbf16, #tpu.memory_space<vmem>>, %arg3: memref<1x64xf32, #tpu.memory_space<vmem>>, %arg4: memref<64x128xbf16, #tpu.memory_space<vmem>>, %arg5: memref<1x128xf32, #tpu.memory_space<vmem>>, %arg6: memref<16x128xf32, #tpu.memory_space<vmem>>) attributes {dimension_semantics = [#tpu.dimension_semantics<parallel>], iteration_bounds = array<i64: 1>, scalar_prefetch = 0 : i64, scratch_operands = 0 : i64, tpu.core_type = #tpu.core_type<tc>, window_params = [{transform_indices = @transform_0, window_bounds = array<i64: 16, 32>}, {pipeline_mode = #tpu.pipeline_mode<synchronous>, transform_indices = @transform_1, window_bounds = array<i64: 32, 64>}, {pipeline_mode = #tpu.pipeline_mode<synchronous>, transform_indices = @transform_2, window_bounds = array<i64: 1, 64>}, {pipeline_mode = #tpu.pipeline_mode<synchronous>, transform_indices = @transform_3, window_bounds = array<i64: 64, 128>}, {pipeline_mode = #tpu.pipeline_mode<synchronous>, transform_indices = @transform_4, window_bounds = array<i64: 1, 128>}, {transform_indices = @transform_5, window_bounds = array<i64: 16, 128>}]} {
    %c0 = arith.constant 0 : index
    %c0_0 = arith.constant 0 : index
    %0 = vector.load %arg1[%c0, %c0_0] : memref<16x32xf32, #tpu.memory_space<vmem>>, vector<16x32xf32>
    %1 = arith.truncf %0 : vector<16x32xf32> to vector<16x32xbf16>
    %c0_1 = arith.constant 0 : index
    %c0_2 = arith.constant 0 : index
    %2 = vector.load %arg2[%c0_1, %c0_2] : memref<32x64xbf16, #tpu.memory_space<vmem>>, vector<32x64xbf16>
    %cst = arith.constant dense<0.000000e+00> : vector<16x64xf32>
    %3 = tpu.matmul %1, %2, %cst {dimension_numbers = #tpu.dot_dimension_numbers<[1], [0], [0], [1], [0, 0, 1, 1], [], []>} : vector<16x32xbf16>, vector<32x64xbf16>, vector<16x64xf32> -> vector<16x64xf32>
    %c0_3 = arith.constant 0 : index
    %c0_4 = arith.constant 0 : index
    %4 = vector.load %arg3[%c0_3, %c0_4] : memref<1x64xf32, #tpu.memory_space<vmem>>, vector<1x64xf32>
    %5 = vector.broadcast %4 : vector<1x64xf32> to vector<16x64xf32>
    %6 = arith.addf %3, %5 : vector<16x64xf32>
    %cst_5 = arith.constant 0.000000e+00 : f32
    %7 = vector.broadcast %cst_5 : f32 to vector<16x64xf32>
    %8 = arith.maximumf %6, %7 : vector<16x64xf32>
    %9 = arith.truncf %8 : vector<16x64xf32> to vector<16x64xbf16>
    %c0_6 = arith.constant 0 : index
    %c0_7 = arith.constant 0 : index
    %10 = vector.load %arg4[%c0_6, %c0_7] : memref<64x128xbf16, #tpu.memory_space<vmem>>, vector<64x128xbf16>
    %cst_8 = arith.constant dense<0.000000e+00> : vector<16x128xf32>
    %11 = tpu.matmul %9, %10, %cst_8 {dimension_numbers = #tpu.dot_dimension_numbers<[1], [0], [0], [1], [0, 0, 1, 1], [], []>} : vector<16x64xbf16>, vector<64x128xbf16>, vector<16x128xf32> -> vector<16x128xf32>
    %c0_9 = arith.constant 0 : index
    %c0_10 = arith.constant 0 : index
    %12 = vector.load %arg5[%c0_9, %c0_10] : memref<1x128xf32, #tpu.memory_space<vmem>>, vector<1x128xf32>
    %13 = vector.broadcast %12 : vector<1x128xf32> to vector<16x128xf32>
    %14 = arith.addf %11, %13 : vector<16x128xf32>
    %c0_11 = arith.constant 0 : index
    %c0_12 = arith.constant 0 : index
    %15 = vector.load %arg6[%c0_11, %c0_12] : memref<16x128xf32, #tpu.memory_space<vmem>>, vector<16x128xf32>
    tpu.vector_store %arg6[%c0_11, %c0_12], %14 {strides = array<i32>} : memref<16x128xf32, #tpu.memory_space<vmem>>, vector<16x128xf32>,
    return
  }
  func.func @transform_0(%arg0: i32) -> (i32, i32) {
    %c0_i32 = arith.constant 0 : i32
    %c0_i32_0 = arith.constant 0 : i32
    return %arg0, %c0_i32 : i32, i32
  }
  func.func @transform_1(%arg0: i32) -> (i32, i32) {
    %c0_i32 = arith.constant 0 : i32
    %c0_i32_0 = arith.constant 0 : i32
    %c0_i32_1 = arith.constant 0 : i32
    return %c0_i32, %c0_i32_0 : i32, i32
  }
  func.func @transform_2(%arg0: i32) -> (i32, i32) {
    %c0_i32 = arith.constant 0 : i32
    %c0_i32_0 = arith.constant 0 : i32
    %c0_i32_1 = arith.constant 0 : i32
    return %c0_i32, %c0_i32_0 : i32, i32
  }
  func.func @transform_3(%arg0: i32) -> (i32, i32) {
    %c0_i32 = arith.constant 0 : i32
    %c0_i32_0 = arith.constant 0 : i32
    %c0_i32_1 = arith.constant 0 : i32
    return %c0_i32, %c0_i32_0 : i32, i32
  }
  func.func @transform_4(%arg0: i32) -> (i32, i32) {
    %c0_i32 = arith.constant 0 : i32
    %c0_i32_0 = arith.constant 0 : i32
    %c0_i32_1 = arith.constant 0 : i32
    return %c0_i32, %c0_i32_0 : i32, i32
  }
  func.func @transform_5(%arg0: i32) -> (i32, i32) {
    %c0_i32 = arith.constant 0 : i32
    %c0_i32_0 = arith.constant 0 : i32
    return %arg0, %c0_i32 : i32, i32
  }
}

</mosaic_0001>

<llo_original>
// kernel: tpu_custom_call.1
$region0: #{tpu_custom_call.1}
  #allocation0 [shape = 'u32[]', space=smem, size = 0x4, offset = 0x4, fixed_abs, tag = 'smem constant byte address 0x4 - core index']
  #allocation1 [shape = 'u32[72,128]{1,0:T(1,128)}', space=vmem, size = 0x9000, scoped, tag = 'internal scratch']
  %s0 = inlined_call_operand.hbm [shape: f32[16,32], index: 0, kind: input, shape index: {}]
  %s1 = inlined_call_operand.hbm [shape: bf16[32,64], index: 1, kind: input, shape index: {}]
  %s2 = inlined_call_operand.vmem [shape: f32[1,64], index: 2, kind: input, shape index: {}]
  %s3 = inlined_call_operand.hbm [shape: bf16[64,128], index: 3, kind: input, shape index: {}]
  %s4 = inlined_call_operand.vmem [shape: f32[1,128], index: 4, kind: input, shape index: {}]
  %s5 = inlined_call_operand.hbm [shape: f32[16,128], index: 5, kind: output, shape index: {}]
  %s6 = sld [smem:[#allocation0]]
  $region42: #{tpu_custom_call.1} parent=0
    _
  %s8 = ssub.s32 1, %s6
  %s9 = scalar_select 0, %s8, %s6
  $region1: #{tpu_custom_call.1} parent=0
    #allocation2 [shape = 'u8[8192]{0}', space=vmem, size = 0x2000, scoped, tag = 'input window, operand 0, single buffered']
    #allocation3 [shape = 's32[1]{0}', space=sflag, size = 0x4, scoped, tag = 'scoped memory for tpu_custom_call.1']
    #allocation4 [shape = 's32[1]{0}', space=sflag, size = 0x4, scoped, tag = 'scoped memory for tpu_custom_call.1']
    #allocation5 [shape = 'u8[8192]{0}', space=vmem, size = 0x2000, scoped, tag = 'input window, operand 1, single buffered']
    #allocation6 [shape = 's32[1]{0}', space=sflag, size = 0x4, scoped, tag = 'scoped memory for tpu_custom_call.1']
    #allocation7 [shape = 'u8[16384]{0}', space=vmem, size = 0x4000, scoped, tag = 'input window, operand 3, single buffered']
    #allocation8 [shape = 'u8[8192]{0}', space=vmem, size = 0x2000, scoped, tag = 'output window, operand 0, single buffered']
    %10 = vsyncpa [#allocation3], 0
    %11 = vsyncpa [#allocation6], 0
    %12 = vsyncpa [#allocation4], 0
    // Predicated region
    $region2: #{tpu_custom_call.1} parent=1 // pred_check
      _
    $region3: #{tpu_custom_call.1} parent=1 // pred_check_branch
      %14 = sbr.rel (0) target = $region5
    $region4: #{tpu_custom_call.1} parent=1 // pred_region
      %16 = vsyncadd [#allocation3], 0
      %s17 = sshll.u32 %s0, 4
      %s18 = int_to_ptr.hbm [resolvable:$true] %s17
      %s19 = sshll.u32 [#allocation2], 4
      %s20 = int_to_ptr.vmem [resolvable:$true] %s19
      %25 = dma.hbm_to_vmem [thread:$0]  %s18, 256, %s20, [#allocation3], 128, 128, 8
    $region5: #{tpu_custom_call.1} parent=1 // pred_fallthru
      _
    // Predicated region
    $region6: #{tpu_custom_call.1} parent=1 // pred_check
      _
    $region7: #{tpu_custom_call.1} parent=1 // pred_check_branch
      %27 = sbr.rel (0) target = $region9
    $region8: #{tpu_custom_call.1} parent=1 // pred_region
      %29 = vsyncadd [#allocation6], 0
      %s30 = sshll.u32 %s1, 4
      %s31 = int_to_ptr.hbm [resolvable:$true] %s30
      %s32 = sshll.u32 [#allocation5], 4
      %s33 = int_to_ptr.vmem [resolvable:$true] %s32
      %38 = dma.hbm_to_vmem [thread:$0]  %s31, 256, %s33, [#allocation6], 64, 64, 4
    $region9: #{tpu_custom_call.1} parent=1 // pred_fallthru
      _
    // Predicated region
    $region10: #{tpu_custom_call.1} parent=1 // pred_check
      _
    $region11: #{tpu_custom_call.1} parent=1 // pred_check_branch
      %40 = sbr.rel (0) target = $region13
    $region12: #{tpu_custom_call.1} parent=1 // pred_region
      _
    $region13: #{tpu_custom_call.1} parent=1 // pred_fallthru
      _
    // Predicated region
    $region14: #{tpu_custom_call.1} parent=1 // pred_check
      _
    $region15: #{tpu_custom_call.1} parent=1 // pred_check_branch
      %42 = sbr.rel (0) target = $region17
    $region16: #{tpu_custom_call.1} parent=1 // pred_region
      %44 = vsyncadd [#allocation6], 0
      %s45 = sshll.u32 %s3, 4
      %s46 = int_to_ptr.hbm [resolvable:$true] %s45
      %s47 = sshll.u32 [#allocation7], 4
      %s48 = int_to_ptr.vmem [resolvable:$true] %s47
      %53 = dma.hbm_to_vmem [thread:$0]  %s46, 512, %s48, [#allocation6], 64, 64, 4
    $region17: #{tpu_custom_call.1} parent=1 // pred_fallthru
      _
    // Predicated region
    $region18: #{tpu_custom_call.1} parent=1 // pred_check
      _
    $region19: #{tpu_custom_call.1} parent=1 // pred_check_branch
      %55 = sbr.rel (0) target = $region21
    $region20: #{tpu_custom_call.1} parent=1 // pred_region
      _
    $region21: #{tpu_custom_call.1} parent=1 // pred_fallthru
      _
    // Predicated region
    $region22: #{tpu_custom_call.1} parent=1 // pred_check
      _
    $region23: #{tpu_custom_call.1} parent=1 // pred_check_branch
      %57 = sbr.rel (0) target = $region25
    $region24: #{tpu_custom_call.1} parent=1 // pred_region
      %59 = dma.done [#allocation3], 256
    $region25: #{tpu_custom_call.1} parent=1 // pred_fallthru
      _
    // Predicated region
    $region26: #{tpu_custom_call.1} parent=1 // pred_check
      _
    $region27: #{tpu_custom_call.1} parent=1 // pred_check_branch
      %61 = sbr.rel (0) target = $region29
    $region28: #{tpu_custom_call.1} parent=1 // pred_region
      %63 = dma.done [#allocation6], 256
    $region29: #{tpu_custom_call.1} parent=1 // pred_fallthru
      _
    // Predicated region
    $region30: #{tpu_custom_call.1} parent=1 // pred_check
      _
    $region31: #{tpu_custom_call.1} parent=1 // pred_check_branch
      %65 = sbr.rel (0) target = $region33
    $region32: #{tpu_custom_call.1} parent=1 // pred_region
      %67 = dma.done [#allocation6], 512
    $region33: #{tpu_custom_call.1} parent=1 // pred_fallthru
      _
    %v69 = vld [vmem:[#allocation2] sm:$0xff]
    %v70 = vld [vmem:[#allocation2 + $0x8] sm:$0xff]
    %v71 = vpack.c.bf16 %v70, %v69
    %v72 = vld [vmem:[#allocation5] sm:$0xf]
    %v73 = vld [vmem:[#allocation5 + $0x4] sm:$0xf]
    %v74 = vld [vmem:[#allocation5 + $0x8] sm:$0xf]
    %v75 = vld [vmem:[#allocation5 + $0xc] sm:$0xf]
    %v76 = vld [vmem:[%s2] sm:$0x1]
    %v78 = vperm.slane %v76, 0
    %v84 = vunpack.c.l.b16 %v72
    %v85 = vunpack.c.l.b16 %v73
    %v86 = vunpack.c.l.b16 %v74
    %v87 = vunpack.c.l.b16 %v75
    %v88 = vpack.c.b16 %v85, %v84
    %v89 = vpack.c.b16 %v87, %v86
    %vm92 = vcmask 261120
    %v94 = vsel %vm92, %v71, 0
    %96 = vmatpush.bf16.msra.mxu0 0
    %97 = vmatpush.bf16.msra.mxu0 0
    %98 = vmatpush.bf16.msra.mxu0 0
    %99 = vmatpush.bf16.msra.mxu0 0
    %100 = vmatpush.bf16.msra.mxu0 0
    %101 = vmatpush.bf16.msra.mxu0 0
    %102 = vmatpush.bf16.msra.mxu0 %v89
    %103 = vmatpush.bf16.msra.mxu0 %v88
    %104 = vmatmul.bf16.gmra.mxu0 %v94
    %v105 = vpop.f32.mrf.mxu0
    %v106 = vadd.f32 %v78, %v105
    %v107 = vpop.f32.mrf.mxu0
    %v108 = vadd.f32 %v78, %v107
    %109 = vdwg.mxu0
    %v110 = vmax.f32 %v106, 0.0
    %v111 = vmax.f32 %v108, 0.0
    %v112 = vpack.c.bf16 %v111, %v110
    %v113 = vld [vmem:[#allocation7] sm:$0xf]
    %v114 = vld [vmem:[#allocation7 + $0x4] sm:$0xf]
    %v115 = vld [vmem:[#allocation7 + $0x8] sm:$0xf]
    %v116 = vld [vmem:[#allocation7 + $0xc] sm:$0xf]
    %v117 = vld [vmem:[#allocation7 + $0x10] sm:$0xf]
    %v118 = vld [vmem:[#allocation7 + $0x14] sm:$0xf]
    %v119 = vld [vmem:[#allocation7 + $0x18] sm:$0xf]
    %v120 = vld [vmem:[#allocation7 + $0x1c] sm:$0xf]
    %v121 = vld [vmem:[%s4] sm:$0x1]
    %v123 = vperm.slane %v121, 0
    %v133 = vunpack.c.l.b16 %v113
    %v134 = vunpack.c.l.b16 %v114
    %v135 = vunpack.c.l.b16 %v115
    %v136 = vunpack.c.l.b16 %v116
    %v137 = vunpack.c.l.b16 %v117
    %v138 = vunpack.c.l.b16 %v118
    %v139 = vunpack.c.l.b16 %v119
    %v140 = vunpack.c.l.b16 %v120
    %v141 = vpack.c.b16 %v134, %v133
    %v142 = vpack.c.b16 %v136, %v135
    %v143 = vpack.c.b16 %v138, %v137
    %v144 = vpack.c.b16 %v140, %v139
    %vm149 = vcmask 523264
    %v151 = vsel %vm149, %v112, 0
    %153 = vmatpush.bf16.msra.mxu0 0
    %154 = vmatpush.bf16.msra.mxu0 0
    %155 = vmatpush.bf16.msra.mxu0 0
    %156 = vmatpush.bf16.msra.mxu0 0
    %157 = vmatpush.bf16.msra.mxu0 %v144
    %158 = vmatpush.bf16.msra.mxu0 %v143
    %159 = vmatpush.bf16.msra.mxu0 %v142
    %160 = vmatpush.bf16.msra.mxu0 %v141
    %161 = vmatmul.bf16.gmra.mxu0 %v151
    %v162 = vpop.f32.mrf.mxu0
    %v163 = vadd.f32 %v123, %v162
    %v164 = vpop.f32.mrf.mxu0
    %v165 = vadd.f32 %v123, %v164
    %166 = vdwg.mxu0
    %167 = vst [vmem:[#allocation8] sm:$0xff] %v163
    %168 = vst [vmem:[#allocation8 + $0x8] sm:$0xff] %v165
    // Predicated region
    $region34: #{tpu_custom_call.1} parent=1 // pred_check
      _
    $region35: #{tpu_custom_call.1} parent=1 // pred_check_branch
      %170 = sbr.rel (0) target = $region37
    $region36: #{tpu_custom_call.1} parent=1 // pred_region
      %172 = vsyncadd [#allocation4], 0
      %s173 = sshll.u32 [#allocation8], 4
      %s174 = int_to_ptr.vmem [resolvable:$true] %s173
      %s175 = sshll.u32 %s5, 4
      %s176 = int_to_ptr.hbm [resolvable:$true] %s175
      %181 = dma.vmem_to_hbm [thread:$0]  %s174, 256, %s176, [#allocation4], 128, 128, 8
    $region37: #{tpu_custom_call.1} parent=1 // pred_fallthru
      _
    // Predicated region
    $region38: #{tpu_custom_call.1} parent=1 // pred_check
      _
    $region39: #{tpu_custom_call.1} parent=1 // pred_check_branch
      %183 = sbr.rel (0) target = $region41
    $region40: #{tpu_custom_call.1} parent=1 // pred_region
      %185 = dma.done [#allocation4], 256
    $region41: #{tpu_custom_call.1} parent=1 // pred_fallthru
      _
    %186 = vsyncpa [#allocation3], 1
    %187 = vsyncpa [#allocation6], 1
    %188 = vsyncpa [#allocation4], 1

// kernel: tpu_custom_call.1
$region0: #{tpu_custom_call.1}
  #allocation0 [shape = 'u32[]', space=smem, size = 0x4, offset = 0x4, fixed_abs, tag = 'smem constant byte address 0x4 - core index']
  #allocation1 [shape = 'u32[72,128]{1,0:T(1,128)}', space=vmem, size = 0x9000, scoped, tag = 'internal scratch']
  %s0 = inlined_call_operand.hbm [shape: f32[16,32], index: 0, kind: input, shape index: {}]
  %s1 = inlined_call_operand.hbm [shape: bf16[32,64], index: 1, kind: input, shape index: {}]
  %s2 = inlined_call_operand.vmem [shape: f32[1,64], index: 2, kind: input, shape index: {}]
  %s3 = inlined_call_operand.hbm [shape: bf16[64,128], index: 3, kind: input, shape index: {}]
  %s4 = inlined_call_operand.vmem [shape: f32[1,128], index: 4, kind: input, shape index: {}]
  %s5 = inlined_call_operand.hbm [shape: f32[16,128], index: 5, kind: output, shape index: {}]
  %s6 = sld [smem:[#allocation0]]
  $region42: #{tpu_custom_call.1} parent=0
    _
  %s8 = ssub.s32 1, %s6
  %s9 = scalar_select 0, %s8, %s6
  $region1: #{tpu_custom_call.1} parent=0
    #allocation2 [shape = 'u8[8192]{0}', space=vmem, size = 0x2000, scoped, tag = 'input window, operand 0, single buffered']
    #allocation3 [shape = 's32[1]{0}', space=sflag, size = 0x4, scoped, tag = 'scoped memory for tpu_custom_call.1']
    #allocation4 [shape = 's32[1]{0}', space=sflag, size = 0x4, scoped, tag = 'scoped memory for tpu_custom_call.1']
    #allocation5 [shape = 'u8[8192]{0}', space=vmem, size = 0x2000, scoped, tag = 'input window, operand 1, single buffered']
    #allocation6 [shape = 's32[1]{0}', space=sflag, size = 0x4, scoped, tag = 'scoped memory for tpu_custom_call.1']
    #allocation7 [shape = 'u8[16384]{0}', space=vmem, size = 0x4000, scoped, tag = 'input window, operand 3, single buffered']
    #allocation8 [shape = 'u8[8192]{0}', space=vmem, size = 0x2000, scoped, tag = 'output window, operand 0, single buffered']
    %10 = vsyncpa [#allocation3], 0
    %11 = vsyncpa [#allocation6], 0
    %12 = vsyncpa [#allocation4], 0
    // Predicated region
    $region2: #{tpu_custom_call.1} parent=1 // pred_check
      _
    $region3: #{tpu_custom_call.1} parent=1 // pred_check_branch
      %14 = sbr.rel (0) target = $region5
    $region4: #{tpu_custom_call.1} parent=1 // pred_region
      %16 = vsyncadd [#allocation3], 0
      %s17 = sshll.u32 %s0, 4
      %s18 = int_to_ptr.hbm [resolvable:$true] %s17
      %s19 = sshll.u32 [#allocation2], 4
      %s20 = int_to_ptr.vmem [resolvable:$true] %s19
      %25 = dma.hbm_to_vmem [thread:$0]  %s18, 256, %s20, [#allocation3], 128, 128, 8
    $region5: #{tpu_custom_call.1} parent=1 // pred_fallthru
      _
    // Predicated region
    $region6: #{tpu_custom_call.1} parent=1 // pred_check
      _
    $region7: #{tpu_custom_call.1} parent=1 // pred_check_branch
      %27 = sbr.rel (0) target = $region9
    $region8: #{tpu_custom_call.1} parent=1 // pred_region
      %29 = vsyncadd [#allocation6], 0
      %s30 = sshll.u32 %s1, 4
      %s31 = int_to_ptr.hbm [resolvable:$true] %s30
      %s32 = sshll.u32 [#allocation5], 4
      %s33 = int_to_ptr.vmem [resolvable:$true] %s32
      %38 = dma.hbm_to_vmem [thread:$0]  %s31, 256, %s33, [#allocation6], 64, 64, 4
    $region9: #{tpu_custom_call.1} parent=1 // pred_fallthru
      _
    // Predicated region
    $region10: #{tpu_custom_call.1} parent=1 // pred_check
      _
    $region11: #{tpu_custom_call.1} parent=1 // pred_check_branch
      %40 = sbr.rel (0) target = $region13
    $region12: #{tpu_custom_call.1} parent=1 // pred_region
      _
    $region13: #{tpu_custom_call.1} parent=1 // pred_fallthru
      _
    // Predicated region
    $region14: #{tpu_custom_call.1} parent=1 // pred_check
      _
    $region15: #{tpu_custom_call.1} parent=1 // pred_check_branch
      %42 = sbr.rel (0) target = $region17
    $region16: #{tpu_custom_call.1} parent=1 // pred_region
      %44 = vsyncadd [#allocation6], 0
      %s45 = sshll.u32 %s3, 4
      %s46 = int_to_ptr.hbm [resolvable:$true] %s45
      %s47 = sshll.u32 [#allocation7], 4
      %s48 = int_to_ptr.vmem [resolvable:$true] %s47
      %53 = dma.hbm_to_vmem [thread:$0]  %s46, 512, %s48, [#allocation6], 64, 64, 4
    $region17: #{tpu_custom_call.1} parent=1 // pred_fallthru
      _
    // Predicated region
    $region18: #{tpu_custom_call.1} parent=1 // pred_check
      _
    $region19: #{tpu_custom_call.1} parent=1 // pred_check_branch
      %55 = sbr.rel (0) target = $region21
    $region20: #{tpu_custom_call.1} parent=1 // pred_region
      _
    $region21: #{tpu_custom_call.1} parent=1 // pred_fallthru
      _
    // Predicated region
    $region22: #{tpu_custom_call.1} parent=1 // pred_check
      _
    $region23: #{tpu_custom_call.1} parent=1 // pred_check_branch
      %57 = sbr.rel (0) target = $region25
    $region24: #{tpu_custom_call.1} parent=1 // pred_region
      %59 = dma.done [#allocation3], 256
    $region25: #{tpu_custom_call.1} parent=1 // pred_fallthru
      _
    // Predicated region
    $region26: #{tpu_custom_call.1} parent=1 // pred_check
      _
    $region27: #{tpu_custom_call.1} parent=1 // pred_check_branch
      %61 = sbr.rel (0) target = $region29
    $region28: #{tpu_custom_call.1} parent=1 // pred_region
      %63 = dma.done [#allocation6], 256
    $region29: #{tpu_custom_call.1} parent=1 // pred_fallthru
      _
    // Predicated region
    $region30: #{tpu_custom_call.1} parent=1 // pred_check
      _
    $region31: #{tpu_custom_call.1} parent=1 // pred_check_branch
      %65 = sbr.rel (0) target = $region33
    $region32: #{tpu_custom_call.1} parent=1 // pred_region
      %67 = dma.done [#allocation6], 512
    $region33: #{tpu_custom_call.1} parent=1 // pred_fallthru
      _
    %v69 = vld [vmem:[#allocation2] sm:$0xff]
    %v70 = vld [vmem:[#allocation2 + $0x8] sm:$0xff]
    %v71 = vpack.c.bf16 %v70, %v69
    %v72 = vld [vmem:[#allocation5] sm:$0xf]
    %v73 = vld [vmem:[#allocation5 + $0x4] sm:$0xf]
    %v74 = vld [vmem:[#allocation5 + $0x8] sm:$0xf]
    %v75 = vld [vmem:[#allocation5 + $0xc] sm:$0xf]
    %v76 = vld [vmem:[%s2] sm:$0x1]
    %v78 = vperm.slane %v76, 0
    %v84 = vunpack.c.l.b16 %v72
    %v85 = vunpack.c.l.b16 %v73
    %v86 = vunpack.c.l.b16 %v74
    %v87 = vunpack.c.l.b16 %v75
    %v88 = vpack.c.b16 %v85, %v84
    %v89 = vpack.c.b16 %v87, %v86
    %vm92 = vcmask 261120
    %v94 = vsel %vm92, %v71, 0
    %96 = vmatpush.bf16.msra.mxu0 0
    %97 = vmatpush.bf16.msra.mxu0 0
    %98 = vmatpush.bf16.msra.mxu0 0
    %99 = vmatpush.bf16.msra.mxu0 0
    %100 = vmatpush.bf16.msra.mxu0 0
    %101 = vmatpush.bf16.msra.mxu0 0
    %102 = vmatpush.bf16.msra.mxu0 %v89
    %103 = vmatpush.bf16.msra.mxu0 %v88
    %104 = vmatmul.bf16.gmra.mxu0 %v94
    %v105 = vpop.f32.mrf.mxu0
    %v106 = vadd.f32 %v78, %v105
    %v107 = vpop.f32.mrf.mxu0
    %v108 = vadd.f32 %v78, %v107
    %109 = vdwg.mxu0
    %v110 = vmax.f32 %v106, 0.0
    %v111 = vmax.f32 %v108, 0.0
    %v112 = vpack.c.bf16 %v111, %v110
    %v113 = vld [vmem:[#allocation7] sm:$0xf]
    %v114 = vld [vmem:[#allocation7 + $0x4] sm:$0xf]
    %v115 = vld [vmem:[#allocation7 + $0x8] sm:$0xf]
    %v116 = vld [vmem:[#allocation7 + $0xc] sm:$0xf]
    %v117 = vld [vmem:[#allocation7 + $0x10] sm:$0xf]
    %v118 = vld [vmem:[#allocation7 + $0x14] sm:$0xf]
    %v119 = vld [vmem:[#allocation7 + $0x18] sm:$0xf]
    %v120 = vld [vmem:[#allocation7 + $0x1c] sm:$0xf]
    %v121 = vld [vmem:[%s4] sm:$0x1]
    %v123 = vperm.slane %v121, 0
    %v133 = vunpack.c.l.b16 %v113
    %v134 = vunpack.c.l.b16 %v114
    %v135 = vunpack.c.l.b16 %v115
    %v136 = vunpack.c.l.b16 %v116
    %v137 = vunpack.c.l.b16 %v117
    %v138 = vunpack.c.l.b16 %v118
    %v139 = vunpack.c.l.b16 %v119
    %v140 = vunpack.c.l.b16 %v120
    %v141 = vpack.c.b16 %v134, %v133
    %v142 = vpack.c.b16 %v136, %v135
    %v143 = vpack.c.b16 %v138, %v137
    %v144 = vpack.c.b16 %v140, %v139
    %vm149 = vcmask 523264
    %v151 = vsel %vm149, %v112, 0
    %153 = vmatpush.bf16.msra.mxu0 0
    %154 = vmatpush.bf16.msra.mxu0 0
    %155 = vmatpush.bf16.msra.mxu0 0
    %156 = vmatpush.bf16.msra.mxu0 0
    %157 = vmatpush.bf16.msra.mxu0 %v144
    %158 = vmatpush.bf16.msra.mxu0 %v143
    %159 = vmatpush.bf16.msra.mxu0 %v142
    %160 = vmatpush.bf16.msra.mxu0 %v141
    %161 = vmatmul.bf16.gmra.mxu0 %v151
    %v162 = vpop.f32.mrf.mxu0
    %v163 = vadd.f32 %v123, %v162
    %v164 = vpop.f32.mrf.mxu0
    %v165 = vadd.f32 %v123, %v164
    %166 = vdwg.mxu0
    %167 = vst [vmem:[#allocation8] sm:$0xff] %v163
    %168 = vst [vmem:[#allocation8 + $0x8] sm:$0xff] %v165
    // Predicated region
    $region34: #{tpu_custom_call.1} parent=1 // pred_check
      _
    $region35: #{tpu_custom_call.1} parent=1 // pred_check_branch
      %170 = sbr.rel (0) target = $region37
    $region36: #{tpu_custom_call.1} parent=1 // pred_region
      %172 = vsyncadd [#allocation4], 0
      %s173 = sshll.u32 [#allocation8], 4
      %s174 = int_to_ptr.vmem [resolvable:$true] %s173
      %s175 = sshll.u32 %s5, 4
      %s176 = int_to_ptr.hbm [resolvable:$true] %s175
      %181 = dma.vmem_to_hbm [thread:$0]  %s174, 256, %s176, [#allocation4], 128, 128, 8
    $region37: #{tpu_custom_call.1} parent=1 // pred_fallthru
      _
    // Predicated region
    $region38: #{tpu_custom_call.1} parent=1 // pred_check
      _
    $region39: #{tpu_custom_call.1} parent=1 // pred_check_branch
      %183 = sbr.rel (0) target = $region41
    $region40: #{tpu_custom_call.1} parent=1 // pred_region
      %185 = dma.done [#allocation4], 256
    $region41: #{tpu_custom_call.1} parent=1 // pred_fallthru
      _
    %186 = vsyncpa [#allocation3], 1
    %187 = vsyncpa [#allocation6], 1
    %188 = vsyncpa [#allocation4], 1

</llo_original>
